<compile_context>
chip_gen: v7x
topology: tpu7x:2x2x1
jax: 0.10.0
libtpu: 0.0.40
codegen_flags: <defaults>
</compile_context>

<pallas_src>
import functools

import jax
import jax.numpy as jnp
from jax import lax
from jax.experimental import pallas as pl
from jax.experimental.pallas import tpu as pltpu

LANE = 128
SUBLANE = 8
_NEG = -1e4  # sentinel logit: sigmoid -> 0, BCE-with-logits contribution -> 0 (exact in f32)


def _round_up(x, m):
    return (x + m - 1) // m * m


def _pad_to_tiles(x, t, neg):
    """Flatten + sentinel-pad to (rows, 128) with rows a multiple of 8."""
    n = x.size
    rows = max(SUBLANE, _round_up(pl.cdiv(n, LANE), SUBLANE))
    pad = rows * LANE - n
    fx = jnp.pad(x.reshape(-1), (0, pad), constant_values=neg).reshape(rows, LANE)
    ft = jnp.pad(t.reshape(-1), (0, pad), constant_values=0).reshape(rows, LANE)
    return fx, ft, rows


def _prep_seg(x, t):
    """Lane-dense (rows, 128) view of the segmentation operands.

    Fast path (element count % 128 == 0, >= 8 rows): pure reshape, no copy
    under jit, no padding.  Slow path: sentinel-padded copy (small tensors or
    non-aligned counts)."""
    n = x.size
    rows = n // LANE
    if n % LANE == 0 and rows >= SUBLANE:
        return x.reshape(rows, LANE), t.reshape(rows, LANE), rows
    return _pad_to_tiles(x, t, _NEG)


def _bce_dice_reg_kernel(params_ref, seg_x_ref, seg_t_ref, reg_x_ref, reg_t_ref,
                         out_ref, acc_bce, acc_inter, acc_union,
                         *, seg_rows, n_seg, n_reg):
    i = pl.program_id(0)
    nsteps = pl.num_programs(0)
    tile_rows = seg_x_ref.shape[0]

    @pl.when(i == 0)
    def _init():
        acc_bce[...] = jnp.zeros_like(acc_bce)
        acc_inter[...] = jnp.zeros_like(acc_inter)
        acc_union[...] = jnp.zeros_like(acc_union)

    def _fold8(v):
        # (tile_rows, 128) -> (8, 128): layout-preserving reshape + leading-axis
        # sum == pure VPU vreg adds (no cross-lane XLU work per tile).
        return v.reshape(tile_rows // SUBLANE, SUBLANE, LANE).sum(axis=0)

    def _accumulate(x, t):
        # Numerically-stable BCE-with-logits and sigmoid sharing one exp(-|x|).
        e = jnp.exp(-jnp.abs(x))
        bce = jnp.maximum(x, 0.0) - x * t + jnp.log1p(e)
        sig = jnp.where(x >= 0.0, 1.0, e) / (1.0 + e)
        acc_bce[...] += _fold8(bce)
        acc_inter[...] += _fold8(sig * t)
        acc_union[...] += _fold8(sig + t)

    x = seg_x_ref[...].astype(jnp.float32)
    t = seg_t_ref[...].astype(jnp.float32)

    # Static (trace-time) raggedness: only when the grid's last tile overhangs
    # the array do we need a row-validity mask -- and only on that tile.
    ragged = (seg_rows % tile_rows) != 0
    if ragged:
        is_last = i == nsteps - 1

        @pl.when(i < nsteps - 1)
        def _bulk():
            _accumulate(x, t)

        @pl.when(is_last)
        def _tail():
            row = lax.broadcasted_iota(jnp.int32, (tile_rows, LANE), 0)
            valid = (i * tile_rows + row) < seg_rows
            _accumulate(jnp.where(valid, x, _NEG), jnp.where(valid, t, 0.0))
    else:
        _accumulate(x, t)

    @pl.when(i == nsteps - 1)
    def _finalize():
        r_reg = params_ref[0]
        alpha = params_ref[1]
        smooth = params_ref[2]

        # Segmentation branch: alpha * BCE + (1 - alpha) * (1 - dice).
        bce_seg = jnp.sum(acc_bce[...]) / n_seg
        inter = jnp.sum(acc_inter[...])
        union = jnp.sum(acc_union[...])
        dice_score = (2.0 * inter + smooth) / (union + smooth)
        loss_s = alpha * bce_seg + (1.0 - alpha) * (1.0 - dice_score)

        # Regression branch: tiny sentinel-padded VMEM operand (pad rows
        # contribute exactly zero), processed once here.
        rx = reg_x_ref[...].astype(jnp.float32)
        rt = reg_t_ref[...].astype(jnp.float32)
        er = jnp.exp(-jnp.abs(rx))
        bce_r = jnp.maximum(rx, 0.0) - rx * rt + jnp.log1p(er)
        loss_r = jnp.sum(bce_r) / n_reg

        out_ref[0, 0] = r_reg * loss_r + (1.0 - r_reg) * loss_s


@functools.partial(jax.jit, static_argnames=("tile_rows",))
def bce_dice_loss_with_reg_loss(logits_seg, logits_reg, targets_seg, targets_reg,
                                r_reg=0.5, alpha=0.5, tile_rows=1024):
    n_seg = int(logits_seg.size)
    n_reg = int(logits_reg.size)

    # Segmentation operands: lane-dense (rows, 128), zero-copy when possible.
    seg_x, seg_t, seg_rows = _prep_seg(logits_seg, targets_seg)

    # Tile height: multiple of 8, never exceeding the array's row count.
    tr = min(_round_up(tile_rows, SUBLANE), seg_rows - seg_rows % SUBLANE)
    grid = pl.cdiv(seg_rows, tr)

    # Regression operands: tiny, one resident sentinel-padded (rows, 128) tile.
    reg_x, reg_t, _ = _pad_to_tiles(logits_reg, targets_reg, _NEG)

    # Hyperparameters as SMEM scalars -> no recompile when they change.
    params = jnp.stack([jnp.asarray(r_reg, jnp.float32),
                        jnp.asarray(alpha, jnp.float32),
                        jnp.asarray(1e-07, jnp.float32)])

    kernel = functools.partial(_bce_dice_reg_kernel,
                               seg_rows=seg_rows, n_seg=n_seg, n_reg=n_reg)

    out = pl.pallas_call(
        kernel,
        out_shape=jax.ShapeDtypeStruct((1, 1), jnp.float32),
        grid_spec=pltpu.PrefetchScalarGridSpec(
            num_scalar_prefetch=0,
            grid=(grid,),
            in_specs=[
                pl.BlockSpec(memory_space=pltpu.SMEM),        # [r_reg, alpha, smooth]
                pl.BlockSpec((tr, LANE), lambda i: (i, 0)),   # seg logits
                pl.BlockSpec((tr, LANE), lambda i: (i, 0)),   # seg targets
                pl.BlockSpec(memory_space=pltpu.VMEM),        # reg logits (tiny)
                pl.BlockSpec(memory_space=pltpu.VMEM),        # reg targets (tiny)
            ],
            out_specs=pl.BlockSpec(memory_space=pltpu.SMEM),  # scalar (1, 1)
            scratch_shapes=[pltpu.VMEM((SUBLANE, LANE), jnp.float32)] * 3,
        ),
        compiler_params=pltpu.CompilerParams(
            dimension_semantics=("arbitrary",),       # reduction axis
            vmem_limit_bytes=32 * 1024 * 1024,        # safe on v5e/v6e/v7x
        ),
    )(params, seg_x, seg_t, reg_x, reg_t)
    return out[0, 0]


def _reference(logits_seg, logits_reg, targets_seg, targets_reg,
               r_reg=0.5, alpha=0.5):
    def bce(x, t):
        return jnp.mean(jnp.maximum(x, 0.0) - x * t + jnp.log1p(jnp.exp(-jnp.abs(x))))

    smooth = 1e-07
    preds = jax.nn.sigmoid(logits_seg).reshape(-1)
    t = targets_seg.reshape(-1)
    dice_score = (2.0 * jnp.sum(preds * t) + smooth) / (jnp.sum(preds) + jnp.sum(t) + smooth)
    loss_s = alpha * bce(logits_seg, targets_seg) + (1.0 - alpha) * (1.0 - dice_score)
    loss_r = bce(logits_reg, targets_reg)
    return r_reg * loss_r + (1.0 - r_reg) * loss_s


if __name__ == "__main__":
    key = jax.random.PRNGKey(0)
    k1, k2, k3, k4 = jax.random.split(key, 4)

    # Primary small shapes: seg head NCHW, reg head (B, n_reg).
    logits_seg = jax.random.normal(k1, (2, 4, 16, 16), dtype=jnp.float32)
    targets_seg = (jax.random.uniform(k2, (2, 4, 16, 16)) > 0.5).astype(jnp.float32)
    logits_reg = jax.random.normal(k3, (2, 4), dtype=jnp.float32)
    targets_reg = (jax.random.uniform(k4, (2, 4)) > 0.5).astype(jnp.float32)

    loss = jax.block_until_ready(
        bce_dice_loss_with_reg_loss(logits_seg, logits_reg, targets_seg, targets_reg))
    ref = _reference(logits_seg, logits_reg, targets_seg, targets_reg)
    assert jnp.allclose(loss, ref, atol=1e-5, rtol=1e-5), (loss, ref)

    # Ragged multi-tile grid (fast path: no host pad, last-tile row mask only),
    # plus non-default hyperparameters exercising the SMEM scalar path.
    ls = jax.random.normal(k1, (2, 4, 24, 24), dtype=jnp.float32)
    ts = (jax.random.uniform(k2, (2, 4, 24, 24)) > 0.5).astype(jnp.float32)
    loss2 = jax.block_until_ready(
        bce_dice_loss_with_reg_loss(ls, logits_reg, ts, targets_reg, r_reg=0.3, alpha=0.7))
    ref2 = _reference(ls, logits_reg, ts, targets_reg, r_reg=0.3, alpha=0.7)
    assert jnp.allclose(loss2, ref2, atol=1e-5, rtol=1e-5), (loss2, ref2)

    # Non-128-aligned element count (sentinel-padded fallback path).
    ls3 = jax.random.normal(k3, (2, 3, 15, 15), dtype=jnp.float32)
    ts3 = (jax.random.uniform(k4, (2, 3, 15, 15)) > 0.5).astype(jnp.float32)
    loss3 = jax.block_until_ready(
        bce_dice_loss_with_reg_loss(ls3, logits_reg, ts3, targets_reg))
    ref3 = _reference(ls3, logits_reg, ts3, targets_reg)
    assert jnp.allclose(loss3, ref3, atol=1e-5, rtol=1e-5), (loss3, ref3)

    print("KERNEL_OK")
</pallas_src>

<mosaic_0001>
module attributes {stable_mosaic.version = 11 : i64} {
  func.func @_bce_dice_reg_kernel(%arg0: i32, %arg1: memref<3xf32, #tpu.memory_space<smem>>, %arg2: memref<16x128xf32, #tpu.memory_space<vmem>>, %arg3: memref<16x128xf32, #tpu.memory_space<vmem>>, %arg4: memref<8x128xf32, #tpu.memory_space<vmem>>, %arg5: memref<8x128xf32, #tpu.memory_space<vmem>>, %arg6: memref<1x1xf32, #tpu.memory_space<smem>>, %arg7: memref<8x128xf32, #tpu.memory_space<vmem>>, %arg8: memref<8x128xf32, #tpu.memory_space<vmem>>, %arg9: memref<8x128xf32, #tpu.memory_space<vmem>>) attributes {dimension_semantics = [#tpu.dimension_semantics<arbitrary>], iteration_bounds = array<i64: 1>, scalar_prefetch = 0 : i64, scratch_operands = 3 : i64, tpu.core_type = #tpu.core_type<tc>, window_params = [{transform_indices = @transform_0, window_bounds = array<i64: 3>}, {transform_indices = @transform_1, window_bounds = array<i64: 16, 128>}, {transform_indices = @transform_2, window_bounds = array<i64: 16, 128>}, {pipeline_mode = #tpu.pipeline_mode<synchronous>, transform_indices = @transform_3, window_bounds = array<i64: 8, 128>}, {pipeline_mode = #tpu.pipeline_mode<synchronous>, transform_indices = @transform_4, window_bounds = array<i64: 8, 128>}, {transform_indices = @transform_5, window_bounds = array<i64: 1, 1>}]} {
    %c0_i32 = arith.constant 0 : i32
    %0 = arith.cmpi eq, %arg0, %c0_i32 : i32
    %1 = arith.extui %0 : i1 to i32
    %c0_i32_0 = arith.constant 0 : i32
    %2 = arith.cmpi ne, %1, %c0_i32_0 : i32
    scf.if %2 {
      %cst_25 = arith.constant 0.000000e+00 : f32
      %42 = vector.broadcast %cst_25 : f32 to vector<8x128xf32>
      %c0_26 = arith.constant 0 : index
      %c0_27 = arith.constant 0 : index
      %43 = vector.load %arg7[%c0_26, %c0_27] : memref<8x128xf32, #tpu.memory_space<vmem>>, vector<8x128xf32>
      tpu.vector_store %arg7[%c0_26, %c0_27], %42 {strides = array<i32>} : memref<8x128xf32, #tpu.memory_space<vmem>>, vector<8x128xf32>,
      %cst_28 = arith.constant 0.000000e+00 : f32
      %44 = vector.broadcast %cst_28 : f32 to vector<8x128xf32>
      %c0_29 = arith.constant 0 : index
      %c0_30 = arith.constant 0 : index
      %45 = vector.load %arg8[%c0_29, %c0_30] : memref<8x128xf32, #tpu.memory_space<vmem>>, vector<8x128xf32>
      tpu.vector_store %arg8[%c0_29, %c0_30], %44 {strides = array<i32>} : memref<8x128xf32, #tpu.memory_space<vmem>>, vector<8x128xf32>,
      %cst_31 = arith.constant 0.000000e+00 : f32
      %46 = vector.broadcast %cst_31 : f32 to vector<8x128xf32>
      %c0_32 = arith.constant 0 : index
      %c0_33 = arith.constant 0 : index
      %47 = vector.load %arg9[%c0_32, %c0_33] : memref<8x128xf32, #tpu.memory_space<vmem>>, vector<8x128xf32>
      tpu.vector_store %arg9[%c0_32, %c0_33], %46 {strides = array<i32>} : memref<8x128xf32, #tpu.memory_space<vmem>>, vector<8x128xf32>,
    } else {
    }
    %c0 = arith.constant 0 : index
    %c0_1 = arith.constant 0 : index
    %3 = vector.load %arg2[%c0, %c0_1] : memref<16x128xf32, #tpu.memory_space<vmem>>, vector<16x128xf32>
    %c0_2 = arith.constant 0 : index
    %c0_3 = arith.constant 0 : index
    %4 = vector.load %arg3[%c0_2, %c0_3] : memref<16x128xf32, #tpu.memory_space<vmem>>, vector<16x128xf32>
    %5 = math.absf %3 : vector<16x128xf32>
    %cst = arith.constant 0.000000e+00 : f32
    %6 = vector.broadcast %cst : f32 to vector<16x128xf32>
    %7 = arith.subf %6, %5 : vector<16x128xf32>
    %8 = math.exp %7 : vector<16x128xf32>
    %cst_4 = arith.constant 0.000000e+00 : f32
    %9 = vector.broadcast %cst_4 : f32 to vector<16x128xf32>
    %10 = arith.maximumf %3, %9 : vector<16x128xf32>
    %11 = arith.mulf %3, %4 : vector<16x128xf32>
    %12 = arith.subf %10, %11 : vector<16x128xf32>
    %13 = math.log1p %8 : vector<16x128xf32>
    %14 = arith.addf %12, %13 : vector<16x128xf32>
    %cst_5 = arith.constant 0.000000e+00 : f32
    %15 = vector.broadcast %cst_5 : f32 to vector<16x128xf32>
    %16 = arith.cmpf oge, %3, %15 : vector<16x128xf32>
    %cst_6 = arith.constant 1.000000e+00 : f32
    %17 = vector.broadcast %cst_6 : f32 to vector<16x128xf32>
    %18 = arith.select %16, %17, %8 : vector<16x128xi1>, vector<16x128xf32>
    %cst_7 = arith.constant 1.000000e+00 : f32
    %19 = vector.broadcast %cst_7 : f32 to vector<16x128xf32>
    %20 = arith.addf %19, %8 : vector<16x128xf32>
    %21 = arith.divf %18, %20 : vector<16x128xf32>
    %c0_8 = arith.constant 0 : index
    %c0_9 = arith.constant 0 : index
    %22 = vector.load %arg7[%c0_8, %c0_9] : memref<8x128xf32, #tpu.memory_space<vmem>>, vector<8x128xf32>
    %23 = vector.shape_cast %14 : vector<16x128xf32> to vector<2x8x128xf32>
    %cst_10 = arith.constant dense<0.000000e+00> : vector<8x128xf32>
    %24 = vector.multi_reduction <add>, %23, %cst_10 [0] : vector<2x8x128xf32> to vector<8x128xf32>
    %25 = arith.addf %22, %24 : vector<8x128xf32>
    %c0_11 = arith.constant 0 : index
    %c0_12 = arith.constant 0 : index
    %26 = vector.load %arg7[%c0_11, %c0_12] : memref<8x128xf32, #tpu.memory_space<vmem>>, vector<8x128xf32>
    tpu.vector_store %arg7[%c0_11, %c0_12], %25 {strides = array<i32>} : memref<8x128xf32, #tpu.memory_space<vmem>>, vector<8x128xf32>,
    %c0_13 = arith.constant 0 : index
    %c0_14 = arith.constant 0 : index
    %27 = vector.load %arg8[%c0_13, %c0_14] : memref<8x128xf32, #tpu.memory_space<vmem>>, vector<8x128xf32>
    %28 = arith.mulf %21, %4 : vector<16x128xf32>
    %29 = vector.shape_cast %28 : vector<16x128xf32> to vector<2x8x128xf32>
    %cst_15 = arith.constant dense<0.000000e+00> : vector<8x128xf32>
    %30 = vector.multi_reduction <add>, %29, %cst_15 [0] : vector<2x8x128xf32> to vector<8x128xf32>
    %31 = arith.addf %27, %30 : vector<8x128xf32>
    %c0_16 = arith.constant 0 : index
    %c0_17 = arith.constant 0 : index
    %32 = vector.load %arg8[%c0_16, %c0_17] : memref<8x128xf32, #tpu.memory_space<vmem>>, vector<8x128xf32>
    tpu.vector_store %arg8[%c0_16, %c0_17], %31 {strides = array<i32>} : memref<8x128xf32, #tpu.memory_space<vmem>>, vector<8x128xf32>,
    %c0_18 = arith.constant 0 : index
    %c0_19 = arith.constant 0 : index
    %33 = vector.load %arg9[%c0_18, %c0_19] : memref<8x128xf32, #tpu.memory_space<vmem>>, vector<8x128xf32>
    %34 = arith.addf %21, %4 : vector<16x128xf32>
    %35 = vector.shape_cast %34 : vector<16x128xf32> to vector<2x8x128xf32>
    %cst_20 = arith.constant dense<0.000000e+00> : vector<8x128xf32>
    %36 = vector.multi_reduction <add>, %35, %cst_20 [0] : vector<2x8x128xf32> to vector<8x128xf32>
    %37 = arith.addf %33, %36 : vector<8x128xf32>
    %c0_21 = arith.constant 0 : index
    %c0_22 = arith.constant 0 : index
    %38 = vector.load %arg9[%c0_21, %c0_22] : memref<8x128xf32, #tpu.memory_space<vmem>>, vector<8x128xf32>
    tpu.vector_store %arg9[%c0_21, %c0_22], %37 {strides = array<i32>} : memref<8x128xf32, #tpu.memory_space<vmem>>, vector<8x128xf32>,
    %c0_i32_23 = arith.constant 0 : i32
    %39 = arith.cmpi eq, %arg0, %c0_i32_23 : i32
    %40 = arith.extui %39 : i1 to i32
    %c0_i32_24 = arith.constant 0 : i32
    %41 = arith.cmpi ne, %40, %c0_i32_24 : i32
    scf.if %41 {
      %c0_25 = arith.constant 0 : index
      %42 = memref.load %arg1[%c0_25] : memref<3xf32, #tpu.memory_space<smem>>
      %c1 = arith.constant 1 : index
      %43 = memref.load %arg1[%c1] : memref<3xf32, #tpu.memory_space<smem>>
      %c2 = arith.constant 2 : index
      %44 = memref.load %arg1[%c2] : memref<3xf32, #tpu.memory_space<smem>>
      %c0_26 = arith.constant 0 : index
      %c0_27 = arith.constant 0 : index
      %45 = vector.load %arg7[%c0_26, %c0_27] : memref<8x128xf32, #tpu.memory_space<vmem>>, vector<8x128xf32>
      %46 = vector.shape_cast %45 : vector<8x128xf32> to vector<1x8x128xf32>
      %cst_28 = arith.constant dense<0.000000e+00> : vector<1xf32>
      %47 = vector.multi_reduction <add>, %46, %cst_28 [1, 2] : vector<1x8x128xf32> to vector<1xf32>
      %48 = vector.shape_cast %47 : vector<1xf32> to vector<1x1x1xf32>
      %49 = vector.extract %48[0, 0, 0] : f32 from vector<1x1x1xf32>
      %cst_29 = arith.constant 2.048000e+03 : f32
      %50 = arith.divf %49, %cst_29 : f32
      %c0_30 = arith.constant 0 : index
      %c0_31 = arith.constant 0 : index
      %51 = vector.load %arg8[%c0_30, %c0_31] : memref<8x128xf32, #tpu.memory_space<vmem>>, vector<8x128xf32>
      %52 = vector.shape_cast %51 : vector<8x128xf32> to vector<1x8x128xf32>
      %cst_32 = arith.constant dense<0.000000e+00> : vector<1xf32>
      %53 = vector.multi_reduction <add>, %52, %cst_32 [1, 2] : vector<1x8x128xf32> to vector<1xf32>
      %54 = vector.shape_cast %53 : vector<1xf32> to vector<1x1x1xf32>
      %55 = vector.extract %54[0, 0, 0] : f32 from vector<1x1x1xf32>
      %c0_33 = arith.constant 0 : index
      %c0_34 = arith.constant 0 : index
      %56 = vector.load %arg9[%c0_33, %c0_34] : memref<8x128xf32, #tpu.memory_space<vmem>>, vector<8x128xf32>
      %57 = vector.shape_cast %56 : vector<8x128xf32> to vector<1x8x128xf32>
      %cst_35 = arith.constant dense<0.000000e+00> : vector<1xf32>
      %58 = vector.multi_reduction <add>, %57, %cst_35 [1, 2] : vector<1x8x128xf32> to vector<1xf32>
      %59 = vector.shape_cast %58 : vector<1xf32> to vector<1x1x1xf32>
      %60 = vector.extract %59[0, 0, 0] : f32 from vector<1x1x1xf32>
      %cst_36 = arith.constant 2.000000e+00 : f32
      %61 = arith.mulf %cst_36, %55 : f32
      %62 = arith.addf %61, %44 : f32
      %63 = arith.addf %60, %44 : f32
      %64 = arith.divf %62, %63 : f32
      %65 = arith.mulf %43, %50 : f32
      %cst_37 = arith.constant 1.000000e+00 : f32
      %66 = arith.subf %cst_37, %43 : f32
      %cst_38 = arith.constant 1.000000e+00 : f32
      %67 = arith.subf %cst_38, %64 : f32
      %68 = arith.mulf %66, %67 : f32
      %69 = arith.addf %65, %68 : f32
      %c0_39 = arith.constant 0 : index
      %c0_40 = arith.constant 0 : index
      %70 = vector.load %arg4[%c0_39, %c0_40] : memref<8x128xf32, #tpu.memory_space<vmem>>, vector<8x128xf32>
      %c0_41 = arith.constant 0 : index
      %c0_42 = arith.constant 0 : index
      %71 = vector.load %arg5[%c0_41, %c0_42] : memref<8x128xf32, #tpu.memory_space<vmem>>, vector<8x128xf32>
      %72 = math.absf %70 : vector<8x128xf32>
      %cst_43 = arith.constant 0.000000e+00 : f32
      %73 = vector.broadcast %cst_43 : f32 to vector<8x128xf32>
      %74 = arith.subf %73, %72 : vector<8x128xf32>
      %75 = math.exp %74 : vector<8x128xf32>
      %cst_44 = arith.constant 0.000000e+00 : f32
      %76 = vector.broadcast %cst_44 : f32 to vector<8x128xf32>
      %77 = arith.maximumf %70, %76 : vector<8x128xf32>
      %78 = arith.mulf %70, %71 : vector<8x128xf32>
      %79 = arith.subf %77, %78 : vector<8x128xf32>
      %80 = math.log1p %75 : vector<8x128xf32>
      %81 = arith.addf %79, %80 : vector<8x128xf32>
      %82 = vector.shape_cast %81 : vector<8x128xf32> to vector<1x8x128xf32>
      %cst_45 = arith.constant dense<0.000000e+00> : vector<1xf32>
      %83 = vector.multi_reduction <add>, %82, %cst_45 [1, 2] : vector<1x8x128xf32> to vector<1xf32>
      %84 = vector.shape_cast %83 : vector<1xf32> to vector<1x1x1xf32>
      %85 = vector.extract %84[0, 0, 0] : f32 from vector<1x1x1xf32>
      %cst_46 = arith.constant 8.000000e+00 : f32
      %86 = arith.divf %85, %cst_46 : f32
      %87 = arith.mulf %42, %86 : f32
      %cst_47 = arith.constant 1.000000e+00 : f32
      %88 = arith.subf %cst_47, %42 : f32
      %89 = arith.mulf %88, %69 : f32
      %90 = arith.addf %87, %89 : f32
      %c0_48 = arith.constant 0 : index
      %c0_49 = arith.constant 0 : index
      %91 = memref.load %arg6[%c0_48, %c0_49] : memref<1x1xf32, #tpu.memory_space<smem>>
      memref.store %90, %arg6[%c0_48, %c0_49] : memref<1x1xf32, #tpu.memory_space<smem>>
    } else {
    }
    return
  }
  func.func @transform_0(%arg0: i32) -> i32 {
    %c0_i32 = arith.constant 0 : i32
    %c0_i32_0 = arith.constant 0 : i32
    return %c0_i32 : i32
  }
  func.func @transform_1(%arg0: i32) -> (i32, i32) {
    %c0_i32 = arith.constant 0 : i32
    %c0_i32_0 = arith.constant 0 : i32
    return %arg0, %c0_i32 : i32, i32
  }
  func.func @transform_2(%arg0: i32) -> (i32, i32) {
    %c0_i32 = arith.constant 0 : i32
    %c0_i32_0 = arith.constant 0 : i32
    return %arg0, %c0_i32 : i32, i32
  }
  func.func @transform_3(%arg0: i32) -> (i32, i32) {
    %c0_i32 = arith.constant 0 : i32
    %c0_i32_0 = arith.constant 0 : i32
    %c0_i32_1 = arith.constant 0 : i32
    return %c0_i32, %c0_i32_0 : i32, i32
  }
  func.func @transform_4(%arg0: i32) -> (i32, i32) {
    %c0_i32 = arith.constant 0 : i32
    %c0_i32_0 = arith.constant 0 : i32
    %c0_i32_1 = arith.constant 0 : i32
    return %c0_i32, %c0_i32_0 : i32, i32
  }
  func.func @transform_5(%arg0: i32) -> (i32, i32) {
    %c0_i32 = arith.constant 0 : i32
    %c0_i32_0 = arith.constant 0 : i32
    %c0_i32_1 = arith.constant 0 : i32
    return %c0_i32, %c0_i32_0 : i32, i32
  }
}

</mosaic_0001>

<llo_original>
// kernel: bce_dice_loss_with_reg_loss.1
$region0: #{bce_dice_loss_with_reg_loss.1}
  #allocation0 [shape = 'u32[]', space=smem, size = 0x4, offset = 0x4, fixed_abs, tag = 'smem constant byte address 0x4 - core index']
  #allocation1 [shape = 'u32[144,128]{1,0:T(1,128)}', space=vmem, size = 0x12000, scoped, tag = 'internal scratch']
  #allocation2 [shape = 'f32[8,128]{1,0:T(8,128)}', space=vmem, size = 0x1000, scoped, tag = 'scratch operand']
  #allocation3 [shape = 'f32[8,128]{1,0:T(8,128)}', space=vmem, size = 0x1000, scoped, tag = 'scratch operand']
  #allocation4 [shape = 'f32[8,128]{1,0:T(8,128)}', space=vmem, size = 0x1000, scoped, tag = 'scratch operand']
  %s0 = inlined_call_operand.vmem [shape: f32[3], index: 0, kind: input, shape index: {}]
  %s1 = inlined_call_operand.vmem [shape: f32[16,128], index: 1, kind: input, shape index: {}]
  %s2 = inlined_call_operand.vmem [shape: f32[16,128], index: 2, kind: input, shape index: {}]
  %s3 = inlined_call_operand.vmem [shape: f32[8,128], index: 3, kind: input, shape index: {}]
  %s4 = inlined_call_operand.vmem [shape: f32[8,128], index: 4, kind: input, shape index: {}]
  %s5 = inlined_call_operand.hbm [shape: f32[1,1], index: 5, kind: output, shape index: {}]
  %s6 = sld [smem:[#allocation0]]
  $region42: #{bce_dice_loss_with_reg_loss.1} parent=0
    _
  %s8 = ssub.s32 1, %s6
  %s9 = scalar_select 0, %s8, %s6
  $region1: #{bce_dice_loss_with_reg_loss.1} parent=0
    #allocation5 [shape = 'u8[512]{0}', space=smem, size = 0x200, scoped, tag = 'input window, operand 0, single buffered']
    #allocation6 [shape = 's32[1]{0}', space=sflag, size = 0x4, scoped, tag = 'scoped memory for bce_dice_loss_with_reg_loss.1']
    #allocation7 [shape = 's32[1]{0}', space=sflag, size = 0x4, scoped, tag = 'scoped memory for bce_dice_loss_with_reg_loss.1']
    #allocation8 [shape = 'u8[512]{0}', space=smem, size = 0x200, scoped, tag = 'output window, operand 0, single buffered']
    %10 = vsyncpa [#allocation7], 0
    %11 = vsyncpa [#allocation6], 0
    // Predicated region
    $region2: #{bce_dice_loss_with_reg_loss.1} parent=1 // pred_check
      _
    $region3: #{bce_dice_loss_with_reg_loss.1} parent=1 // pred_check_branch
      %13 = sbr.rel (0) target = $region5
    $region4: #{bce_dice_loss_with_reg_loss.1} parent=1 // pred_region
      %s15 = ssub.s32 16, 16
      %16 = vsyncadd [#allocation7], %s15
      %s18 = sshll.u32 %s0, 4
      %s19 = int_to_ptr.vmem [resolvable:$true] %s18
      %21 = dma.vmem_to_smem %s19, 16, [#allocation5], [#allocation7]
    $region5: #{bce_dice_loss_with_reg_loss.1} parent=1 // pred_fallthru
      _
    // Predicated region
    $region6: #{bce_dice_loss_with_reg_loss.1} parent=1 // pred_check
      _
    $region7: #{bce_dice_loss_with_reg_loss.1} parent=1 // pred_check_branch
      %23 = sbr.rel (0) target = $region9
    $region8: #{bce_dice_loss_with_reg_loss.1} parent=1 // pred_region
      _
    $region9: #{bce_dice_loss_with_reg_loss.1} parent=1 // pred_fallthru
      _
    // Predicated region
    $region10: #{bce_dice_loss_with_reg_loss.1} parent=1 // pred_check
      _
    $region11: #{bce_dice_loss_with_reg_loss.1} parent=1 // pred_check_branch
      %25 = sbr.rel (0) target = $region13
    $region12: #{bce_dice_loss_with_reg_loss.1} parent=1 // pred_region
      _
    $region13: #{bce_dice_loss_with_reg_loss.1} parent=1 // pred_fallthru
      _
    // Predicated region
    $region14: #{bce_dice_loss_with_reg_loss.1} parent=1 // pred_check
      _
    $region15: #{bce_dice_loss_with_reg_loss.1} parent=1 // pred_check_branch
      %27 = sbr.rel (0) target = $region17
    $region16: #{bce_dice_loss_with_reg_loss.1} parent=1 // pred_region
      _
    $region17: #{bce_dice_loss_with_reg_loss.1} parent=1 // pred_fallthru
      _
    // Predicated region
    $region18: #{bce_dice_loss_with_reg_loss.1} parent=1 // pred_check
      _
    $region19: #{bce_dice_loss_with_reg_loss.1} parent=1 // pred_check_branch
      %29 = sbr.rel (0) target = $region21
    $region20: #{bce_dice_loss_with_reg_loss.1} parent=1 // pred_region
      _
    $region21: #{bce_dice_loss_with_reg_loss.1} parent=1 // pred_fallthru
      _
    // Predicated region
    $region22: #{bce_dice_loss_with_reg_loss.1} parent=1 // pred_check
      _
    $region23: #{bce_dice_loss_with_reg_loss.1} parent=1 // pred_check_branch
      %31 = sbr.rel (0) target = $region25
    $region24: #{bce_dice_loss_with_reg_loss.1} parent=1 // pred_region
      %32 = dma.done [#allocation7], 16
    $region25: #{bce_dice_loss_with_reg_loss.1} parent=1 // pred_fallthru
      _
    %33 = sfence
    %p34 = scmp.eq.s32.totalorder 0, 0
    // Predicated region
    $region26: #{bce_dice_loss_with_reg_loss.1} parent=1 // pred_check
      %p35 = pneg %p34
    $region27: #{bce_dice_loss_with_reg_loss.1} parent=1 // pred_check_branch
      %37 = sbr.rel (%p35) target = $region29
    $region28: #{bce_dice_loss_with_reg_loss.1} parent=1 // pred_region
      %38 = vst [vmem:[#allocation2] sm:$0xff] 0.0
      %39 = vst [vmem:[#allocation3] sm:$0xff] 0.0
      %40 = vst [vmem:[#allocation4] sm:$0xff] 0.0
    $region29: #{bce_dice_loss_with_reg_loss.1} parent=1 // pred_fallthru
      _
    %v41 = vld [vmem:[%s1] sm:$0xff]
    %v42 = vld [vmem:[%s1 + $0x8] sm:$0xff]
    %v43 = vld [vmem:[%s2] sm:$0xff]
    %v44 = vld [vmem:[%s2 + $0x8] sm:$0xff]
    %v45 = vand.u32 2147483647, %v41
    %v46 = vand.u32 2147483647, %v42
    %v47 = vsub.f32 0.0, %v45
    %v48 = vsub.f32 0.0, %v46
    %v49 = vmul.f32 %v47, 1.442695
    %v50 = vpow.pop %v49
    %v51 = vmul.f32 %v48, 1.442695
    %v52 = vpow.pop %v51
    %v53 = vmax.f32 %v41, 0.0
    %v54 = vmax.f32 %v42, 0.0
    %v55 = vmul.f32 %v41, %v43
    %v56 = vmul.f32 %v42, %v44
    %v57 = vsub.f32 %v53, %v55
    %v58 = vsub.f32 %v54, %v56
    %v59 = vadd.f32 %v50, 1.0
    %v60 = vlog2.pop %v59
    %v61 = vmul.f32 %v60, 0.6931472
    %v62 = vmul.f32 -0.5, %v50
    %v63 = vadd.f32 %v62, 1.0
    %v64 = vmul.f32 %v63, %v50
    %v65 = vand.u32 2147483647, %v50
    %vm66 = vcmp.lt.f32.partialorder %v65, 0.0004427343
    %v67 = vsel %vm66, %v64, %v61
    %v68 = vadd.f32 %v52, 1.0
    %v69 = vlog2.pop %v68
    %v70 = vmul.f32 %v69, 0.6931472
    %v71 = vmul.f32 -0.5, %v52
    %v72 = vadd.f32 %v71, 1.0
    %v73 = vmul.f32 %v72, %v52
    %v74 = vand.u32 2147483647, %v52
    %vm75 = vcmp.lt.f32.partialorder %v74, 0.0004427343
    %v76 = vsel %vm75, %v73, %v70
    %v77 = vadd.f32 %v57, %v67
    %v78 = vadd.f32 %v58, %v76
    %vm79 = vcmp.ge.f32.partialorder %v41, 0.0
    %vm80 = vcmp.ge.f32.partialorder %v42, 0.0
    %v81 = vsel %vm79, 1.0, %v50
    %v82 = vsel %vm80, 1.0, %v52
    %v83 = vadd.f32 %v50, 1.0
    %v84 = vadd.f32 %v52, 1.0
    %v85 = vrcp.pop %v83
    %v86 = vmul.f32 %v81, %v85
    %v87 = vrcp.pop %v84
    %v88 = vmul.f32 %v82, %v87
    %v89 = vld [vmem:[#allocation2] sm:$0xff]
    %v90 = vadd.f32 %v77, %v78
    %v91 = vadd.f32 %v89, %v90
    %92 = vst [vmem:[#allocation2] sm:$0xff] %v91
    %v93 = vld [vmem:[#allocation3] sm:$0xff]
    %v94 = vmul.f32 %v86, %v43
    %v95 = vmul.f32 %v88, %v44
    %v96 = vadd.f32 %v94, %v95
    %v97 = vadd.f32 %v93, %v96
    %98 = vst [vmem:[#allocation3] sm:$0xff] %v97
    %v99 = vld [vmem:[#allocation4] sm:$0xff]
    %v100 = vadd.f32 %v86, %v43
    %v101 = vadd.f32 %v88, %v44
    %v102 = vadd.f32 %v100, %v101
    %v103 = vadd.f32 %v99, %v102
    %104 = vst [vmem:[#allocation4] sm:$0xff] %v103
    // Predicated region
    $region30: #{bce_dice_loss_with_reg_loss.1} parent=1 // pred_check
      %p105 = pneg %p34
    $region31: #{bce_dice_loss_with_reg_loss.1} parent=1 // pred_check_branch
      %107 = sbr.rel (%p105) target = $region33
    $region32: #{bce_dice_loss_with_reg_loss.1} parent=1 // pred_region
      %s108 = sld [smem:[#allocation5]]
      %s109 = sld [smem:[#allocation5 + $0x1]]
      %s110 = sld [smem:[#allocation5 + $0x2]]
      %v111 = vld [vmem:[#allocation2] sm:$0xff]
      %112 = vadd.xlane.f32.xlu0 %v111
      %v113 = vpop.xlane.xlu0 %112
      %v114 = vrot.slane %v113, 4
      %v115 = vadd.f32 %v113, %v114
      %v116 = vrot.slane %v115, 2
      %v117 = vadd.f32 %v115, %v116
      %v118 = vrot.slane %v117, 1
      %v119 = vadd.f32 %v117, %v118
      %s120 = vtos %v119
      %v121 = vrcp.pop 2048.0
      %s122 = vtos %v121
      %s123 = smul.f32 %s120, %s122
      %v124 = vld [vmem:[#allocation3] sm:$0xff]
      %125 = vadd.xlane.f32.xlu0 %v124
      %v126 = vpop.xlane.xlu0 %125
      %v127 = vrot.slane %v126, 4
      %v128 = vadd.f32 %v126, %v127
      %v129 = vrot.slane %v128, 2
      %v130 = vadd.f32 %v128, %v129
      %v131 = vrot.slane %v130, 1
      %v132 = vadd.f32 %v130, %v131
      %s133 = vtos %v132
      %v134 = vld [vmem:[#allocation4] sm:$0xff]
      %135 = vadd.xlane.f32.xlu0 %v134
      %v136 = vpop.xlane.xlu0 %135
      %v137 = vrot.slane %v136, 4
      %v138 = vadd.f32 %v136, %v137
      %v139 = vrot.slane %v138, 2
      %v140 = vadd.f32 %v138, %v139
      %v141 = vrot.slane %v140, 1
      %v142 = vadd.f32 %v140, %v141
      %s143 = vtos %v142
      %s144 = smul.f32 %s133, 2.0
      %s145 = sadd.f32 %s144, %s110
      %s146 = sadd.f32 %s143, %s110
      %v147 = vstv %s146
      %v148 = vrcp.pop %v147
      %s149 = vtos %v148
      %s150 = smul.f32 %s145, %s149
      %s151 = smul.f32 %s109, %s123
      %s152 = ssub.f32 1.0, %s109
      %s153 = ssub.f32 1.0, %s150
      %s154 = smul.f32 %s152, %s153
      %s155 = sadd.f32 %s151, %s154
      %v156 = vld [vmem:[%s3] sm:$0xff]
      %v157 = vld [vmem:[%s4] sm:$0xff]
      %v158 = vand.u32 2147483647, %v156
      %v159 = vsub.f32 0.0, %v158
      %v160 = vmul.f32 %v159, 1.442695
      %v161 = vpow.pop %v160
      %v162 = vmax.f32 %v156, 0.0
      %v163 = vmul.f32 %v156, %v157
      %v164 = vsub.f32 %v162, %v163
      %v165 = vadd.f32 %v161, 1.0
      %v166 = vlog2.pop %v165
      %v167 = vmul.f32 %v166, 0.6931472
      %v168 = vmul.f32 -0.5, %v161
      %v169 = vadd.f32 %v168, 1.0
      %v170 = vmul.f32 %v169, %v161
      %v171 = vand.u32 2147483647, %v161
      %vm172 = vcmp.lt.f32.partialorder %v171, 0.0004427343
      %v173 = vsel %vm172, %v170, %v167
      %v174 = vadd.f32 %v164, %v173
      %175 = vadd.xlane.f32.xlu0 %v174
      %v176 = vpop.xlane.xlu0 %175
      %v177 = vrot.slane %v176, 4
      %v178 = vadd.f32 %v176, %v177
      %v179 = vrot.slane %v178, 2
      %v180 = vadd.f32 %v178, %v179
      %v181 = vrot.slane %v180, 1
      %v182 = vadd.f32 %v180, %v181
      %s183 = vtos %v182
      %v184 = vrcp.pop 8.0
      %s185 = vtos %v184
      %s186 = smul.f32 %s183, %s185
      %s187 = smul.f32 %s108, %s186
      %s188 = ssub.f32 1.0, %s108
      %s189 = smul.f32 %s188, %s155
      %s190 = sadd.f32 %s187, %s189
      %s191 = scalar_lea.smem [#allocation8], 0
      %192 = sst [smem:[%s191]] %s190
    $region33: #{bce_dice_loss_with_reg_loss.1} parent=1 // pred_fallthru
      _
    // Predicated region
    $region34: #{bce_dice_loss_with_reg_loss.1} parent=1 // pred_check
      _
    $region35: #{bce_dice_loss_with_reg_loss.1} parent=1 // pred_check_branch
      %194 = sbr.rel (0) target = $region37
    $region36: #{bce_dice_loss_with_reg_loss.1} parent=1 // pred_region
      %s196 = ssub.s32 16, 16
      %197 = vsyncadd [#allocation6], %s196
      %200 = dma.smem_to_hbm [#allocation8], 16, %s5, [#allocation6]
    $region37: #{bce_dice_loss_with_reg_loss.1} parent=1 // pred_fallthru
      _
    // Predicated region
    $region38: #{bce_dice_loss_with_reg_loss.1} parent=1 // pred_check
      _
    $region39: #{bce_dice_loss_with_reg_loss.1} parent=1 // pred_check_branch
      %202 = sbr.rel (0) target = $region41
    $region40: #{bce_dice_loss_with_reg_loss.1} parent=1 // pred_region
      %203 = dma.done [#allocation6], 16
    $region41: #{bce_dice_loss_with_reg_loss.1} parent=1 // pred_fallthru
      _
    %204 = sfence
    %205 = vsyncpa [#allocation6], 1
    %206 = vsyncpa [#allocation7], 1

</llo_original>
